<compile_context>
chip_gen: v5e
topology: v5e:2x2
jax: 0.10.0
libtpu: 0.0.40
codegen_flags: <defaults>
</compile_context>

<pallas_src>
import functools

import jax
import jax.numpy as jnp
from jax.experimental import pallas as pl
from jax.experimental.pallas import tpu as pltpu

# TODO(synk): PyTorch's forward hooks (self.ac1/ac2/aco) are introspection-only and
# are intentionally not materialized as extra kernel outputs.

INPUT_SIZE = 28 * 28  # 784


def mlp_kernel(x_ref, w1_ref, b1_ref, w2_ref, b2_ref, wo_ref, bo_ref, o_ref):
    # Cast x to bf16 in VMEM (kernel is HBM-bound; the VPU cast is free-ish).
    x = x_ref[...].astype(jnp.bfloat16)
    # fc1 + sigmoid  (bf16 operands, f32 accumulation, f32 bias/sigmoid)
    h1 = jax.nn.sigmoid(
        jnp.dot(x, w1_ref[...], preferred_element_type=jnp.float32) + b1_ref[...]
    )
    # fc2 + sigmoid
    h2 = jax.nn.sigmoid(
        jnp.dot(h1.astype(jnp.bfloat16), w2_ref[...],
                preferred_element_type=jnp.float32)
        + b2_ref[...]
    )
    # fco + sigmoid -> un-padded 10-wide store (masked vst, trivial at this size)
    o_ref[...] = jax.nn.sigmoid(
        jnp.dot(h2.astype(jnp.bfloat16), wo_ref[...],
                preferred_element_type=jnp.float32)
        + bo_ref[...]
    ).astype(o_ref.dtype)


def _round_up(n, m):
    return ((n + m - 1) // m) * m


def _choose_tiling(batch):
    """Pick (tile_b, padded_batch).

    Small batches: one tile rounded to 16 rows (bf16 sublane packing).
    Larger batches: largest power-of-two tile in [128, 1024] trading per-step
    overhead (~0.35us ~= 128 rows of x DMA) against padded-row waste, preferring
    >= 2 grid steps so the "parallel" axis can use both TensorCores on v7x.
    """
    if batch <= 256:
        tile_b = _round_up(batch, 16)
        return tile_b, tile_b
    best = None
    for tile_b in (1024, 512, 256, 128):
        padded = _round_up(batch, tile_b)
        steps = padded // tile_b
        waste = padded - batch
        cost = steps * 128 + waste
        key = (steps < 2, cost, -tile_b)
        if best is None or key < best[0]:
            best = (key, tile_b, padded)
    return best[1], best[2]


@functools.partial(jax.jit, static_argnames=())
def mnist_net_forward(x, w1, b1, w2, b2, wo, bo):
    """Forward pass of MNISTNet. x is flattened to (-1, 784) like x.view(-1, 28*28).

    Params are in (in, out) layout (transpose of torch.nn.Linear.weight), biases (1, out).
    """
    x2d = x.reshape(-1, INPUT_SIZE)
    if not jnp.issubdtype(x2d.dtype, jnp.floating):
        x2d = x2d.astype(jnp.float32)
    batch = x2d.shape[0]
    h1_size = w1.shape[1]
    h2_size = w2.shape[1]
    out_size = wo.shape[1]

    # ---- tiling -------------------------------------------------------------------
    tile_b, padded_batch = _choose_tiling(batch)
    grid = (padded_batch // tile_b,)

    # ---- operands -----------------------------------------------------------------
    # x: no feature-dim padding, no wrapper cast. Pad batch rows only if needed.
    if padded_batch != batch:
        x_in = jnp.pad(x2d, ((0, padded_batch - batch), (0, 0)))
    else:
        x_in = x2d
    # Weights in bf16 (fetched once per call, resident in VMEM); biases in f32.
    w1_b = w1.astype(jnp.bfloat16)
    w2_b = w2.astype(jnp.bfloat16)
    wo_b = wo.astype(jnp.bfloat16)
    b1_f = b1.astype(jnp.float32)
    b2_f = b2.astype(jnp.float32)
    bo_f = bo.astype(jnp.float32)

    # ---- specs --------------------------------------------------------------------
    resident = lambda *_: (0, 0)  # weights/biases stay in VMEM across the grid
    in_specs = [
        pl.BlockSpec((tile_b, INPUT_SIZE), lambda i: (i, 0)),  # x tile streams
        pl.BlockSpec((INPUT_SIZE, h1_size), resident),         # w1
        pl.BlockSpec((1, h1_size), resident),                  # b1
        pl.BlockSpec((h1_size, h2_size), resident),            # w2
        pl.BlockSpec((1, h2_size), resident),                  # b2
        pl.BlockSpec((h2_size, out_size), resident),           # wo
        pl.BlockSpec((1, out_size), resident),                 # bo
    ]
    out_spec = pl.BlockSpec((tile_b, out_size), lambda i: (i, 0))

    x_bytes = x_in.dtype.itemsize
    flops = 2 * padded_batch * (INPUT_SIZE * h1_size + h1_size * h2_size
                                + h2_size * out_size)
    transcendentals = padded_batch * (h1_size + h2_size + out_size)
    bytes_accessed = (
        padded_batch * INPUT_SIZE * x_bytes                                  # x
        + (INPUT_SIZE * h1_size + h1_size * h2_size + h2_size * out_size) * 2  # weights
        + (h1_size + h2_size + out_size) * 4                                 # biases
        + padded_batch * out_size * 4                                        # output
    )

    out_padded = pl.pallas_call(
        mlp_kernel,
        out_shape=jax.ShapeDtypeStruct((padded_batch, out_size), jnp.float32),
        grid=grid,
        in_specs=in_specs,
        out_specs=out_spec,
        compiler_params=pltpu.CompilerParams(
            dimension_semantics=("parallel",),
        ),
        cost_estimate=pl.CostEstimate(
            flops=flops,
            transcendentals=transcendentals,
            bytes_accessed=bytes_accessed,
        ),
    )(x_in, w1_b, b1_f, w2_b, b2_f, wo_b, bo_f)

    # Strip batch padding (no column slice needed: output is already 10-wide).
    if padded_batch != batch:
        return out_padded[:batch]
    return out_padded


def init_params(key, input_size, hidden1_size, hidden2_size, output_size):
    """Deterministic PyTorch-Linear-style uniform init; weights stored (in, out)."""
    def linear(k, fan_in, fan_out):
        kw, kb = jax.random.split(k)
        bound = 1.0 / jnp.sqrt(fan_in)
        w = jax.random.uniform(kw, (fan_in, fan_out), jnp.float32, -bound, bound)
        b = jax.random.uniform(kb, (1, fan_out), jnp.float32, -bound, bound)
        return w, b

    k1, k2, k3 = jax.random.split(key, 3)
    w1, b1 = linear(k1, input_size, hidden1_size)
    w2, b2 = linear(k2, hidden1_size, hidden2_size)
    wo, bo = linear(k3, hidden2_size, output_size)
    return w1, b1, w2, b2, wo, bo


def _reference_forward(x, w1, b1, w2, b2, wo, bo):
    x2d = x.reshape(-1, INPUT_SIZE).astype(jnp.float32)
    h1 = jax.nn.sigmoid(x2d @ w1 + b1)
    h2 = jax.nn.sigmoid(h1 @ w2 + b2)
    return jax.nn.sigmoid(h2 @ wo + bo)


if __name__ == "__main__":
    # forward() hard-codes x.view(-1, 28*28) => input_size must be 784.
    input_size = INPUT_SIZE
    hidden1_size = 64
    hidden2_size = 32
    output_size = 10
    batch = 8

    key = jax.random.PRNGKey(0)
    k_params, k_x = jax.random.split(key)
    w1, b1, w2, b2, wo, bo = init_params(
        k_params, input_size, hidden1_size, hidden2_size, output_size
    )
    # Input as MNIST-like images (B, 1, 28, 28); the wrapper flattens to (B, 784).
    x = jax.random.normal(k_x, (batch, 1, 28, 28), jnp.float32)

    out = mnist_net_forward(x, w1, b1, w2, b2, wo, bo)
    out = jax.block_until_ready(out)

    assert out.shape == (batch, output_size)
    assert bool(jnp.all((out > 0.0) & (out < 1.0)))  # sigmoid range sanity check

    # Numerical sanity vs. a pure-JAX f32 reference (kernel uses bf16 operands,
    # f32 accumulation, so tolerance is loose but tight enough to catch wiring bugs).
    ref = _reference_forward(x, w1, b1, w2, b2, wo, bo)
    assert float(jnp.max(jnp.abs(out - ref))) < 5e-2

    print("KERNEL_OK")
</pallas_src>

<mosaic_0001>
module attributes {stable_mosaic.version = 11 : i64} {
  func.func @mlp_kernel(%arg0: i32, %arg1: memref<16x784xf32, #tpu.memory_space<vmem>>, %arg2: memref<784x64xbf16, #tpu.memory_space<vmem>>, %arg3: memref<1x64xf32, #tpu.memory_space<vmem>>, %arg4: memref<64x32xbf16, #tpu.memory_space<vmem>>, %arg5: memref<1x32xf32, #tpu.memory_space<vmem>>, %arg6: memref<32x10xbf16, #tpu.memory_space<vmem>>, %arg7: memref<1x10xf32, #tpu.memory_space<vmem>>, %arg8: memref<16x10xf32, #tpu.memory_space<vmem>>) attributes {dimension_semantics = [#tpu.dimension_semantics<parallel>], iteration_bounds = array<i64: 1>, scalar_prefetch = 0 : i64, scratch_operands = 0 : i64, tpu.core_type = #tpu.core_type<tc>, window_params = [{transform_indices = @transform_0, window_bounds = array<i64: 16, 784>}, {pipeline_mode = #tpu.pipeline_mode<synchronous>, transform_indices = @transform_1, window_bounds = array<i64: 784, 64>}, {pipeline_mode = #tpu.pipeline_mode<synchronous>, transform_indices = @transform_2, window_bounds = array<i64: 1, 64>}, {pipeline_mode = #tpu.pipeline_mode<synchronous>, transform_indices = @transform_3, window_bounds = array<i64: 64, 32>}, {pipeline_mode = #tpu.pipeline_mode<synchronous>, transform_indices = @transform_4, window_bounds = array<i64: 1, 32>}, {pipeline_mode = #tpu.pipeline_mode<synchronous>, transform_indices = @transform_5, window_bounds = array<i64: 32, 10>}, {pipeline_mode = #tpu.pipeline_mode<synchronous>, transform_indices = @transform_6, window_bounds = array<i64: 1, 10>}, {transform_indices = @transform_7, window_bounds = array<i64: 16, 10>}]} {
    %c0 = arith.constant 0 : index
    %c0_0 = arith.constant 0 : index
    %0 = vector.load %arg1[%c0, %c0_0] : memref<16x784xf32, #tpu.memory_space<vmem>>, vector<16x784xf32>
    %1 = arith.truncf %0 : vector<16x784xf32> to vector<16x784xbf16>
    %c0_1 = arith.constant 0 : index
    %c0_2 = arith.constant 0 : index
    %2 = vector.load %arg2[%c0_1, %c0_2] : memref<784x64xbf16, #tpu.memory_space<vmem>>, vector<784x64xbf16>
    %cst = arith.constant dense<0.000000e+00> : vector<16x64xf32>
    %3 = tpu.matmul %1, %2, %cst {dimension_numbers = #tpu.dot_dimension_numbers<[1], [0], [0], [1], [0, 0, 1, 1], [], []>} : vector<16x784xbf16>, vector<784x64xbf16>, vector<16x64xf32> -> vector<16x64xf32>
    %c0_3 = arith.constant 0 : index
    %c0_4 = arith.constant 0 : index
    %4 = vector.load %arg3[%c0_3, %c0_4] : memref<1x64xf32, #tpu.memory_space<vmem>>, vector<1x64xf32>
    %5 = vector.broadcast %4 : vector<1x64xf32> to vector<16x64xf32>
    %6 = arith.addf %3, %5 : vector<16x64xf32>
    %7 = arith.negf %6 : vector<16x64xf32>
    %8 = math.exp %7 : vector<16x64xf32>
    %cst_5 = arith.constant 1.000000e+00 : f32
    %9 = vector.broadcast %cst_5 : f32 to vector<16x64xf32>
    %10 = arith.addf %9, %8 : vector<16x64xf32>
    %11 = arith.divf %9, %10 : vector<16x64xf32>
    %12 = arith.truncf %11 : vector<16x64xf32> to vector<16x64xbf16>
    %c0_6 = arith.constant 0 : index
    %c0_7 = arith.constant 0 : index
    %13 = vector.load %arg4[%c0_6, %c0_7] : memref<64x32xbf16, #tpu.memory_space<vmem>>, vector<64x32xbf16>
    %cst_8 = arith.constant dense<0.000000e+00> : vector<16x32xf32>
    %14 = tpu.matmul %12, %13, %cst_8 {dimension_numbers = #tpu.dot_dimension_numbers<[1], [0], [0], [1], [0, 0, 1, 1], [], []>} : vector<16x64xbf16>, vector<64x32xbf16>, vector<16x32xf32> -> vector<16x32xf32>
    %c0_9 = arith.constant 0 : index
    %c0_10 = arith.constant 0 : index
    %15 = vector.load %arg5[%c0_9, %c0_10] : memref<1x32xf32, #tpu.memory_space<vmem>>, vector<1x32xf32>
    %16 = vector.broadcast %15 : vector<1x32xf32> to vector<16x32xf32>
    %17 = arith.addf %14, %16 : vector<16x32xf32>
    %18 = arith.negf %17 : vector<16x32xf32>
    %19 = math.exp %18 : vector<16x32xf32>
    %cst_11 = arith.constant 1.000000e+00 : f32
    %20 = vector.broadcast %cst_11 : f32 to vector<16x32xf32>
    %21 = arith.addf %20, %19 : vector<16x32xf32>
    %22 = arith.divf %20, %21 : vector<16x32xf32>
    %23 = arith.truncf %22 : vector<16x32xf32> to vector<16x32xbf16>
    %c0_12 = arith.constant 0 : index
    %c0_13 = arith.constant 0 : index
    %24 = vector.load %arg6[%c0_12, %c0_13] : memref<32x10xbf16, #tpu.memory_space<vmem>>, vector<32x10xbf16>
    %cst_14 = arith.constant dense<0.000000e+00> : vector<16x10xf32>
    %25 = tpu.matmul %23, %24, %cst_14 {dimension_numbers = #tpu.dot_dimension_numbers<[1], [0], [0], [1], [0, 0, 1, 1], [], []>} : vector<16x32xbf16>, vector<32x10xbf16>, vector<16x10xf32> -> vector<16x10xf32>
    %c0_15 = arith.constant 0 : index
    %c0_16 = arith.constant 0 : index
    %26 = vector.load %arg7[%c0_15, %c0_16] : memref<1x10xf32, #tpu.memory_space<vmem>>, vector<1x10xf32>
    %27 = vector.broadcast %26 : vector<1x10xf32> to vector<16x10xf32>
    %28 = arith.addf %25, %27 : vector<16x10xf32>
    %29 = arith.negf %28 : vector<16x10xf32>
    %30 = math.exp %29 : vector<16x10xf32>
    %cst_17 = arith.constant 1.000000e+00 : f32
    %31 = vector.broadcast %cst_17 : f32 to vector<16x10xf32>
    %32 = arith.addf %31, %30 : vector<16x10xf32>
    %33 = arith.divf %31, %32 : vector<16x10xf32>
    %c0_18 = arith.constant 0 : index
    %c0_19 = arith.constant 0 : index
    %34 = vector.load %arg8[%c0_18, %c0_19] : memref<16x10xf32, #tpu.memory_space<vmem>>, vector<16x10xf32>
    tpu.vector_store %arg8[%c0_18, %c0_19], %33 {strides = array<i32>} : memref<16x10xf32, #tpu.memory_space<vmem>>, vector<16x10xf32>,
    return
  }
  func.func @transform_0(%arg0: i32) -> (i32, i32) {
    %c0_i32 = arith.constant 0 : i32
    %c0_i32_0 = arith.constant 0 : i32
    return %arg0, %c0_i32 : i32, i32
  }
  func.func @transform_1(%arg0: i32) -> (i32, i32) {
    %c0_i32 = arith.constant 0 : i32
    %c0_i32_0 = arith.constant 0 : i32
    %c0_i32_1 = arith.constant 0 : i32
    return %c0_i32, %c0_i32_0 : i32, i32
  }
  func.func @transform_2(%arg0: i32) -> (i32, i32) {
    %c0_i32 = arith.constant 0 : i32
    %c0_i32_0 = arith.constant 0 : i32
    %c0_i32_1 = arith.constant 0 : i32
    return %c0_i32, %c0_i32_0 : i32, i32
  }
  func.func @transform_3(%arg0: i32) -> (i32, i32) {
    %c0_i32 = arith.constant 0 : i32
    %c0_i32_0 = arith.constant 0 : i32
    %c0_i32_1 = arith.constant 0 : i32
    return %c0_i32, %c0_i32_0 : i32, i32
  }
  func.func @transform_4(%arg0: i32) -> (i32, i32) {
    %c0_i32 = arith.constant 0 : i32
    %c0_i32_0 = arith.constant 0 : i32
    %c0_i32_1 = arith.constant 0 : i32
    return %c0_i32, %c0_i32_0 : i32, i32
  }
  func.func @transform_5(%arg0: i32) -> (i32, i32) {
    %c0_i32 = arith.constant 0 : i32
    %c0_i32_0 = arith.constant 0 : i32
    %c0_i32_1 = arith.constant 0 : i32
    return %c0_i32, %c0_i32_0 : i32, i32
  }
  func.func @transform_6(%arg0: i32) -> (i32, i32) {
    %c0_i32 = arith.constant 0 : i32
    %c0_i32_0 = arith.constant 0 : i32
    %c0_i32_1 = arith.constant 0 : i32
    return %c0_i32, %c0_i32_0 : i32, i32
  }
  func.func @transform_7(%arg0: i32) -> (i32, i32) {
    %c0_i32 = arith.constant 0 : i32
    %c0_i32_0 = arith.constant 0 : i32
    return %arg0, %c0_i32 : i32, i32
  }
}

</mosaic_0001>

<llo_original>
// kernel: mnist_net_forward.1
$region0: #{mnist_net_forward.1}
  #allocation0 [shape = 'u32[]', space=smem, size = 0x4, offset = 0x4, fixed_abs, tag = 'smem constant byte address 0x4 - core index']
  #allocation1 [shape = 'u32[72,128]{1,0:T(1,128)}', space=vmem, size = 0x9000, scoped, tag = 'internal scratch']
  %s0 = inlined_call_operand.vmem [shape: f32[16,784], index: 0, kind: input, shape index: {}]
  %s1 = inlined_call_operand.vmem [shape: bf16[784,64], index: 1, kind: input, shape index: {}]
  %s2 = inlined_call_operand.vmem [shape: f32[1,64], index: 2, kind: input, shape index: {}]
  %s3 = inlined_call_operand.vmem [shape: bf16[64,32], index: 3, kind: input, shape index: {}]
  %s4 = inlined_call_operand.vmem [shape: f32[1,32], index: 4, kind: input, shape index: {}]
  %s5 = inlined_call_operand.vmem [shape: bf16[32,10], index: 5, kind: input, shape index: {}]
  %s6 = inlined_call_operand.vmem [shape: f32[1,10], index: 6, kind: input, shape index: {}]
  %s7 = inlined_call_operand.vmem [shape: f32[16,10], index: 7, kind: output, shape index: {}]
  %s8 = sld [smem:[#allocation0]]
  $region38: #{mnist_net_forward.1} parent=0
    _
  %s10 = ssub.s32 1, %s8
  %s11 = scalar_select 0, %s10, %s8
  // Predicated region
  $region2: #{mnist_net_forward.1} parent=0 // pred_check
    _
  $region3: #{mnist_net_forward.1} parent=0 // pred_check_branch
    %13 = sbr.rel (0) target = $region5
  $region4: #{mnist_net_forward.1} parent=0 // pred_region
    _
  $region5: #{mnist_net_forward.1} parent=0 // pred_fallthru
    _
  // Predicated region
  $region6: #{mnist_net_forward.1} parent=0 // pred_check
    _
  $region7: #{mnist_net_forward.1} parent=0 // pred_check_branch
    %15 = sbr.rel (0) target = $region9
  $region8: #{mnist_net_forward.1} parent=0 // pred_region
    _
  $region9: #{mnist_net_forward.1} parent=0 // pred_fallthru
    _
  // Predicated region
  $region10: #{mnist_net_forward.1} parent=0 // pred_check
    _
  $region11: #{mnist_net_forward.1} parent=0 // pred_check_branch
    %17 = sbr.rel (0) target = $region13
  $region12: #{mnist_net_forward.1} parent=0 // pred_region
    _
  $region13: #{mnist_net_forward.1} parent=0 // pred_fallthru
    _
  // Predicated region
  $region14: #{mnist_net_forward.1} parent=0 // pred_check
    _
  $region15: #{mnist_net_forward.1} parent=0 // pred_check_branch
    %19 = sbr.rel (0) target = $region17
  $region16: #{mnist_net_forward.1} parent=0 // pred_region
    _
  $region17: #{mnist_net_forward.1} parent=0 // pred_fallthru
    _
  // Predicated region
  $region18: #{mnist_net_forward.1} parent=0 // pred_check
    _
  $region19: #{mnist_net_forward.1} parent=0 // pred_check_branch
    %21 = sbr.rel (0) target = $region21
  $region20: #{mnist_net_forward.1} parent=0 // pred_region
    _
  $region21: #{mnist_net_forward.1} parent=0 // pred_fallthru
    _
  // Predicated region
  $region22: #{mnist_net_forward.1} parent=0 // pred_check
    _
  $region23: #{mnist_net_forward.1} parent=0 // pred_check_branch
    %23 = sbr.rel (0) target = $region25
  $region24: #{mnist_net_forward.1} parent=0 // pred_region
    _
  $region25: #{mnist_net_forward.1} parent=0 // pred_fallthru
    _
  // Predicated region
  $region26: #{mnist_net_forward.1} parent=0 // pred_check
    _
  $region27: #{mnist_net_forward.1} parent=0 // pred_check_branch
    %25 = sbr.rel (0) target = $region29
  $region28: #{mnist_net_forward.1} parent=0 // pred_region
    _
  $region29: #{mnist_net_forward.1} parent=0 // pred_fallthru
    _
  %v27 = vld [vmem:[%s0] sm:$0xff]
  %v28 = vld [vmem:[%s0 + $0x8] sm:$0xff]
  %v29 = vld [vmem:[%s0 + $0x10] sm:$0xff]
  %v30 = vld [vmem:[%s0 + $0x18] sm:$0xff]
  %v31 = vld [vmem:[%s0 + $0x20] sm:$0xff]
  %v32 = vld [vmem:[%s0 + $0x28] sm:$0xff]
  %v33 = vld [vmem:[%s0 + $0x30] sm:$0xff]
  %v34 = vld [vmem:[%s0 + $0x38] sm:$0xff]
  %v35 = vld [vmem:[%s0 + $0x40] sm:$0xff]
  %v36 = vld [vmem:[%s0 + $0x48] sm:$0xff]
  %v37 = vld [vmem:[%s0 + $0x50] sm:$0xff]
  %v38 = vld [vmem:[%s0 + $0x58] sm:$0xff]
  %v39 = vld [vmem:[%s0 + $0x60] sm:$0xff]
  %v40 = vld [vmem:[%s0 + $0x68] sm:$0xff]
  %v41 = vpack.c.bf16 %v34, %v27
  %v42 = vpack.c.bf16 %v35, %v28
  %v43 = vpack.c.bf16 %v36, %v29
  %v44 = vpack.c.bf16 %v37, %v30
  %v45 = vpack.c.bf16 %v38, %v31
  %v46 = vpack.c.bf16 %v39, %v32
  %v47 = vpack.c.bf16 %v40, %v33
  %v48 = vld [vmem:[%s1] sm:$0xf]
  %v49 = vld [vmem:[%s1 + $0x4] sm:$0xf]
  %v50 = vld [vmem:[%s1 + $0x8] sm:$0xf]
  %v51 = vld [vmem:[%s1 + $0xc] sm:$0xf]
  %v52 = vld [vmem:[%s1 + $0x10] sm:$0xf]
  %v53 = vld [vmem:[%s1 + $0x14] sm:$0xf]
  %v54 = vld [vmem:[%s1 + $0x18] sm:$0xf]
  %v55 = vld [vmem:[%s1 + $0x1c] sm:$0xf]
  %v56 = vld [vmem:[%s1 + $0x20] sm:$0xf]
  %v57 = vld [vmem:[%s1 + $0x24] sm:$0xf]
  %v58 = vld [vmem:[%s1 + $0x28] sm:$0xf]
  %v59 = vld [vmem:[%s1 + $0x2c] sm:$0xf]
  %v60 = vld [vmem:[%s1 + $0x30] sm:$0xf]
  %v61 = vld [vmem:[%s1 + $0x34] sm:$0xf]
  %v62 = vld [vmem:[%s1 + $0x38] sm:$0xf]
  %v63 = vld [vmem:[%s1 + $0x3c] sm:$0xf]
  %v64 = vld [vmem:[%s1 + $0x40] sm:$0xf]
  %v65 = vld [vmem:[%s1 + $0x44] sm:$0xf]
  %v66 = vld [vmem:[%s1 + $0x48] sm:$0xf]
  %v67 = vld [vmem:[%s1 + $0x4c] sm:$0xf]
  %v68 = vld [vmem:[%s1 + $0x50] sm:$0xf]
  %v69 = vld [vmem:[%s1 + $0x54] sm:$0xf]
  %v70 = vld [vmem:[%s1 + $0x58] sm:$0xf]
  %v71 = vld [vmem:[%s1 + $0x5c] sm:$0xf]
  %v72 = vld [vmem:[%s1 + $0x60] sm:$0xf]
  %v73 = vld [vmem:[%s1 + $0x64] sm:$0xf]
  %v74 = vld [vmem:[%s1 + $0x68] sm:$0xf]
  %v75 = vld [vmem:[%s1 + $0x6c] sm:$0xf]
  %v76 = vld [vmem:[%s1 + $0x70] sm:$0xf]
  %v77 = vld [vmem:[%s1 + $0x74] sm:$0xf]
  %v78 = vld [vmem:[%s1 + $0x78] sm:$0xf]
  %v79 = vld [vmem:[%s1 + $0x7c] sm:$0xf]
  %v80 = vld [vmem:[%s1 + $0x80] sm:$0xf]
  %v81 = vld [vmem:[%s1 + $0x84] sm:$0xf]
  %v82 = vld [vmem:[%s1 + $0x88] sm:$0xf]
  %v83 = vld [vmem:[%s1 + $0x8c] sm:$0xf]
  %v84 = vld [vmem:[%s1 + $0x90] sm:$0xf]
  %v85 = vld [vmem:[%s1 + $0x94] sm:$0xf]
  %v86 = vld [vmem:[%s1 + $0x98] sm:$0xf]
  %v87 = vld [vmem:[%s1 + $0x9c] sm:$0xf]
  %v88 = vld [vmem:[%s1 + $0xa0] sm:$0xf]
  %v89 = vld [vmem:[%s1 + $0xa4] sm:$0xf]
  %v90 = vld [vmem:[%s1 + $0xa8] sm:$0xf]
  %v91 = vld [vmem:[%s1 + $0xac] sm:$0xf]
  %v92 = vld [vmem:[%s1 + $0xb0] sm:$0xf]
  %v93 = vld [vmem:[%s1 + $0xb4] sm:$0xf]
  %v94 = vld [vmem:[%s1 + $0xb8] sm:$0xf]
  %v95 = vld [vmem:[%s1 + $0xbc] sm:$0xf]
  %v96 = vld [vmem:[%s1 + $0xc0] sm:$0xf]
  %v97 = vld [vmem:[%s1 + $0xc4] sm:$0xf]
  %v98 = vld [vmem:[%s1 + $0xc8] sm:$0xf]
  %v99 = vld [vmem:[%s1 + $0xcc] sm:$0xf]
  %v100 = vld [vmem:[%s1 + $0xd0] sm:$0xf]
  %v101 = vld [vmem:[%s1 + $0xd4] sm:$0xf]
  %v102 = vld [vmem:[%s1 + $0xd8] sm:$0xf]
  %v103 = vld [vmem:[%s1 + $0xdc] sm:$0xf]
  %v104 = vld [vmem:[%s1 + $0xe0] sm:$0xf]
  %v105 = vld [vmem:[%s1 + $0xe4] sm:$0xf]
  %v106 = vld [vmem:[%s1 + $0xe8] sm:$0xf]
  %v107 = vld [vmem:[%s1 + $0xec] sm:$0xf]
  %v108 = vld [vmem:[%s1 + $0xf0] sm:$0xf]
  %v109 = vld [vmem:[%s1 + $0xf4] sm:$0xf]
  %v110 = vld [vmem:[%s1 + $0xf8] sm:$0xf]
  %v111 = vld [vmem:[%s1 + $0xfc] sm:$0xf]
  %v112 = vld [vmem:[%s1 + $0x100] sm:$0xf]
  %v113 = vld [vmem:[%s1 + $0x104] sm:$0xf]
  %v114 = vld [vmem:[%s1 + $0x108] sm:$0xf]
  %v115 = vld [vmem:[%s1 + $0x10c] sm:$0xf]
  %v116 = vld [vmem:[%s1 + $0x110] sm:$0xf]
  %v117 = vld [vmem:[%s1 + $0x114] sm:$0xf]
  %v118 = vld [vmem:[%s1 + $0x118] sm:$0xf]
  %v119 = vld [vmem:[%s1 + $0x11c] sm:$0xf]
  %v120 = vld [vmem:[%s1 + $0x120] sm:$0xf]
  %v121 = vld [vmem:[%s1 + $0x124] sm:$0xf]
  %v122 = vld [vmem:[%s1 + $0x128] sm:$0xf]
  %v123 = vld [vmem:[%s1 + $0x12c] sm:$0xf]
  %v124 = vld [vmem:[%s1 + $0x130] sm:$0xf]
  %v125 = vld [vmem:[%s1 + $0x134] sm:$0xf]
  %v126 = vld [vmem:[%s1 + $0x138] sm:$0xf]
  %v127 = vld [vmem:[%s1 + $0x13c] sm:$0xf]
  %v128 = vld [vmem:[%s1 + $0x140] sm:$0xf]
  %v129 = vld [vmem:[%s1 + $0x144] sm:$0xf]
  %v130 = vld [vmem:[%s1 + $0x148] sm:$0xf]
  %v131 = vld [vmem:[%s1 + $0x14c] sm:$0xf]
  %v132 = vld [vmem:[%s1 + $0x150] sm:$0xf]
  %v133 = vld [vmem:[%s1 + $0x154] sm:$0xf]
  %v134 = vld [vmem:[%s1 + $0x158] sm:$0xf]
  %v135 = vld [vmem:[%s1 + $0x15c] sm:$0xf]
  %v136 = vld [vmem:[%s1 + $0x160] sm:$0xf]
  %v137 = vld [vmem:[%s1 + $0x164] sm:$0xf]
  %v138 = vld [vmem:[%s1 + $0x168] sm:$0xf]
  %v139 = vld [vmem:[%s1 + $0x16c] sm:$0xf]
  %v140 = vld [vmem:[%s1 + $0x170] sm:$0xf]
  %v141 = vld [vmem:[%s1 + $0x174] sm:$0xf]
  %v142 = vld [vmem:[%s1 + $0x178] sm:$0xf]
  %v143 = vld [vmem:[%s1 + $0x17c] sm:$0xf]
  %v144 = vld [vmem:[%s1 + $0x180] sm:$0xf]
  %v145 = vld [vmem:[%s1 + $0x184] sm:$0xf]
  %v146 = vld [vmem:[%s2] sm:$0x1]
  %v148 = vperm.slane %v146, 0
  %v248 = vunpack.c.l.b16 %v48
  %v249 = vunpack.c.l.b16 %v49
  %v250 = vunpack.c.l.b16 %v50
  %v251 = vunpack.c.l.b16 %v51
  %v252 = vunpack.c.l.b16 %v52
  %v253 = vunpack.c.l.b16 %v53
  %v254 = vunpack.c.l.b16 %v54
  %v255 = vunpack.c.l.b16 %v55
  %v256 = vunpack.c.l.b16 %v56
  %v257 = vunpack.c.l.b16 %v57
  %v258 = vunpack.c.l.b16 %v58
  %v259 = vunpack.c.l.b16 %v59
  %v260 = vunpack.c.l.b16 %v60
  %v261 = vunpack.c.l.b16 %v61
  %v262 = vunpack.c.l.b16 %v62
  %v263 = vunpack.c.l.b16 %v63
  %v264 = vunpack.c.l.b16 %v64
  %v265 = vunpack.c.l.b16 %v65
  %v266 = vunpack.c.l.b16 %v66
  %v267 = vunpack.c.l.b16 %v67
  %v268 = vunpack.c.l.b16 %v68
  %v269 = vunpack.c.l.b16 %v69
  %v270 = vunpack.c.l.b16 %v70
  %v271 = vunpack.c.l.b16 %v71
  %v272 = vunpack.c.l.b16 %v72
  %v273 = vunpack.c.l.b16 %v73
  %v274 = vunpack.c.l.b16 %v74
  %v275 = vunpack.c.l.b16 %v75
  %v276 = vunpack.c.l.b16 %v76
  %v277 = vunpack.c.l.b16 %v77
  %v278 = vunpack.c.l.b16 %v78
  %v279 = vunpack.c.l.b16 %v79
  %v280 = vunpack.c.l.b16 %v80
  %v281 = vunpack.c.l.b16 %v81
  %v282 = vunpack.c.l.b16 %v82
  %v283 = vunpack.c.l.b16 %v83
  %v284 = vunpack.c.l.b16 %v84
  %v285 = vunpack.c.l.b16 %v85
  %v286 = vunpack.c.l.b16 %v86
  %v287 = vunpack.c.l.b16 %v87
  %v288 = vunpack.c.l.b16 %v88
  %v289 = vunpack.c.l.b16 %v89
  %v290 = vunpack.c.l.b16 %v90
  %v291 = vunpack.c.l.b16 %v91
  %v292 = vunpack.c.l.b16 %v92
  %v293 = vunpack.c.l.b16 %v93
  %v294 = vunpack.c.l.b16 %v94
  %v295 = vunpack.c.l.b16 %v95
  %v296 = vunpack.c.l.b16 %v96
  %v297 = vunpack.c.l.b16 %v97
  %v298 = vunpack.c.l.b16 %v98
  %v299 = vunpack.c.l.b16 %v99
  %v300 = vunpack.c.l.b16 %v100
  %v301 = vunpack.c.l.b16 %v101
  %v302 = vunpack.c.l.b16 %v102
  %v303 = vunpack.c.l.b16 %v103
  %v304 = vunpack.c.l.b16 %v104
  %v305 = vunpack.c.l.b16 %v105
  %v306 = vunpack.c.l.b16 %v106
  %v307 = vunpack.c.l.b16 %v107
  %v308 = vunpack.c.l.b16 %v108
  %v309 = vunpack.c.l.b16 %v109
  %v310 = vunpack.c.l.b16 %v110
  %v311 = vunpack.c.l.b16 %v111
  %v312 = vunpack.c.l.b16 %v112
  %v313 = vunpack.c.l.b16 %v113
  %v314 = vunpack.c.l.b16 %v114
  %v315 = vunpack.c.l.b16 %v115
  %v316 = vunpack.c.l.b16 %v116
  %v317 = vunpack.c.l.b16 %v117
  %v318 = vunpack.c.l.b16 %v118
  %v319 = vunpack.c.l.b16 %v119
  %v320 = vunpack.c.l.b16 %v120
  %v321 = vunpack.c.l.b16 %v121
  %v322 = vunpack.c.l.b16 %v122
  %v323 = vunpack.c.l.b16 %v123
  %v324 = vunpack.c.l.b16 %v124
  %v325 = vunpack.c.l.b16 %v125
  %v326 = vunpack.c.l.b16 %v126
  %v327 = vunpack.c.l.b16 %v127
  %v328 = vunpack.c.l.b16 %v128
  %v329 = vunpack.c.l.b16 %v129
  %v330 = vunpack.c.l.b16 %v130
  %v331 = vunpack.c.l.b16 %v131
  %v332 = vunpack.c.l.b16 %v132
  %v333 = vunpack.c.l.b16 %v133
  %v334 = vunpack.c.l.b16 %v134
  %v335 = vunpack.c.l.b16 %v135
  %v336 = vunpack.c.l.b16 %v136
  %v337 = vunpack.c.l.b16 %v137
  %v338 = vunpack.c.l.b16 %v138
  %v339 = vunpack.c.l.b16 %v139
  %v340 = vunpack.c.l.b16 %v140
  %v341 = vunpack.c.l.b16 %v141
  %v342 = vunpack.c.l.b16 %v142
  %v343 = vunpack.c.l.b16 %v143
  %v344 = vunpack.c.l.b16 %v144
  %v345 = vunpack.c.l.b16 %v145
  %v346 = vpack.c.b16 %v249, %v248
  %v347 = vpack.c.b16 %v251, %v250
  %v348 = vpack.c.b16 %v253, %v252
  %v349 = vpack.c.b16 %v255, %v254
  %v350 = vpack.c.b16 %v257, %v256
  %v351 = vpack.c.b16 %v259, %v258
  %v352 = vpack.c.b16 %v261, %v260
  %v353 = vpack.c.b16 %v263, %v262
  %v354 = vpack.c.b16 %v265, %v264
  %v355 = vpack.c.b16 %v267, %v266
  %v356 = vpack.c.b16 %v269, %v268
  %v357 = vpack.c.b16 %v271, %v270
  %v358 = vpack.c.b16 %v273, %v272
  %v359 = vpack.c.b16 %v275, %v274
  %v360 = vpack.c.b16 %v277, %v276
  %v361 = vpack.c.b16 %v279, %v278
  %v362 = vpack.c.b16 %v281, %v280
  %v363 = vpack.c.b16 %v283, %v282
  %v364 = vpack.c.b16 %v285, %v284
  %v365 = vpack.c.b16 %v287, %v286
  %v366 = vpack.c.b16 %v289, %v288
  %v367 = vpack.c.b16 %v291, %v290
  %v368 = vpack.c.b16 %v293, %v292
  %v369 = vpack.c.b16 %v295, %v294
  %v370 = vpack.c.b16 %v297, %v296
  %v371 = vpack.c.b16 %v299, %v298
  %v372 = vpack.c.b16 %v301, %v300
  %v373 = vpack.c.b16 %v303, %v302
  %v374 = vpack.c.b16 %v305, %v304
  %v375 = vpack.c.b16 %v307, %v306
  %v376 = vpack.c.b16 %v309, %v308
  %v377 = vpack.c.b16 %v311, %v310
  %v378 = vpack.c.b16 %v313, %v312
  %v379 = vpack.c.b16 %v315, %v314
  %v380 = vpack.c.b16 %v317, %v316
  %v381 = vpack.c.b16 %v319, %v318
  %v382 = vpack.c.b16 %v321, %v320
  %v383 = vpack.c.b16 %v323, %v322
  %v384 = vpack.c.b16 %v325, %v324
  %v385 = vpack.c.b16 %v327, %v326
  %v386 = vpack.c.b16 %v329, %v328
  %v387 = vpack.c.b16 %v331, %v330
  %v388 = vpack.c.b16 %v333, %v332
  %v389 = vpack.c.b16 %v335, %v334
  %v390 = vpack.c.b16 %v337, %v336
  %v391 = vpack.c.b16 %v339, %v338
  %v392 = vpack.c.b16 %v341, %v340
  %v393 = vpack.c.b16 %v343, %v342
  %v394 = vpack.c.b16 %v345, %v344
  %vm444 = vcmask 130048
  %v446 = vsel %vm444, %v47, 0
  %448 = vmatpush.bf16.msra.mxu0 %v353
  %449 = vmatpush.bf16.msra.mxu0 %v352
  %450 = vmatpush.bf16.msra.mxu0 %v351
  %451 = vmatpush.bf16.msra.mxu0 %v350
  %452 = vmatpush.bf16.msra.mxu0 %v349
  %453 = vmatpush.bf16.msra.mxu0 %v348
  %454 = vmatpush.bf16.msra.mxu0 %v347
  %455 = vmatpush.bf16.msra.mxu0 %v346
  %456 = vmatmul.bf16.gmra.mxu0 %v41
  %v457 = vpop.f32.mrf.mxu0
  %v458 = vadd.f32 %v148, %v457
  %v459 = vpop.f32.mrf.mxu0
  %v460 = vadd.f32 %v148, %v459
  %461 = vdwg.mxu0
  %462 = vmatpush.bf16.msra.mxu0 %v361
  %463 = vmatpush.bf16.msra.mxu0 %v360
  %464 = vmatpush.bf16.msra.mxu0 %v359
  %465 = vmatpush.bf16.msra.mxu0 %v358
  %466 = vmatpush.bf16.msra.mxu0 %v357
  %467 = vmatpush.bf16.msra.mxu0 %v356
  %468 = vmatpush.bf16.msra.mxu0 %v355
  %469 = vmatpush.bf16.msra.mxu0 %v354
  %470 = vmatmul.bf16.gmra.mxu0 %v42
  %v471 = vpop.f32.mrf.mxu0
  %v472 = vadd.f32 %v458, %v471
  %v473 = vpop.f32.mrf.mxu0
  %v474 = vadd.f32 %v460, %v473
  %475 = vdwg.mxu0
  %476 = vmatpush.bf16.msra.mxu0 %v369
  %477 = vmatpush.bf16.msra.mxu0 %v368
  %478 = vmatpush.bf16.msra.mxu0 %v367
  %479 = vmatpush.bf16.msra.mxu0 %v366
  %480 = vmatpush.bf16.msra.mxu0 %v365
  %481 = vmatpush.bf16.msra.mxu0 %v364
  %482 = vmatpush.bf16.msra.mxu0 %v363
  %483 = vmatpush.bf16.msra.mxu0 %v362
  %484 = vmatmul.bf16.gmra.mxu0 %v43
  %v485 = vpop.f32.mrf.mxu0
  %v486 = vadd.f32 %v472, %v485
  %v487 = vpop.f32.mrf.mxu0
  %v488 = vadd.f32 %v474, %v487
  %489 = vdwg.mxu0
  %490 = vmatpush.bf16.msra.mxu0 %v377
  %491 = vmatpush.bf16.msra.mxu0 %v376
  %492 = vmatpush.bf16.msra.mxu0 %v375
  %493 = vmatpush.bf16.msra.mxu0 %v374
  %494 = vmatpush.bf16.msra.mxu0 %v373
  %495 = vmatpush.bf16.msra.mxu0 %v372
  %496 = vmatpush.bf16.msra.mxu0 %v371
  %497 = vmatpush.bf16.msra.mxu0 %v370
  %498 = vmatmul.bf16.gmra.mxu0 %v44
  %v499 = vpop.f32.mrf.mxu0
  %v500 = vadd.f32 %v486, %v499
  %v501 = vpop.f32.mrf.mxu0
  %v502 = vadd.f32 %v488, %v501
  %503 = vdwg.mxu0
  %504 = vmatpush.bf16.msra.mxu0 %v385
  %505 = vmatpush.bf16.msra.mxu0 %v384
  %506 = vmatpush.bf16.msra.mxu0 %v383
  %507 = vmatpush.bf16.msra.mxu0 %v382
  %508 = vmatpush.bf16.msra.mxu0 %v381
  %509 = vmatpush.bf16.msra.mxu0 %v380
  %510 = vmatpush.bf16.msra.mxu0 %v379
  %511 = vmatpush.bf16.msra.mxu0 %v378
  %512 = vmatmul.bf16.gmra.mxu0 %v45
  %v513 = vpop.f32.mrf.mxu0
  %v514 = vadd.f32 %v500, %v513
  %v515 = vpop.f32.mrf.mxu0
  %v516 = vadd.f32 %v502, %v515
  %517 = vdwg.mxu0
  %518 = vmatpush.bf16.msra.mxu0 %v393
  %519 = vmatpush.bf16.msra.mxu0 %v392
  %520 = vmatpush.bf16.msra.mxu0 %v391
  %521 = vmatpush.bf16.msra.mxu0 %v390
  %522 = vmatpush.bf16.msra.mxu0 %v389
  %523 = vmatpush.bf16.msra.mxu0 %v388
  %524 = vmatpush.bf16.msra.mxu0 %v387
  %525 = vmatpush.bf16.msra.mxu0 %v386
  %526 = vmatmul.bf16.gmra.mxu0 %v46
  %v527 = vpop.f32.mrf.mxu0
  %v528 = vadd.f32 %v514, %v527
  %v529 = vpop.f32.mrf.mxu0
  %v530 = vadd.f32 %v516, %v529
  %531 = vdwg.mxu0
  %532 = vmatpush.bf16.msra.mxu0 0
  %533 = vmatpush.bf16.msra.mxu0 0
  %534 = vmatpush.bf16.msra.mxu0 0
  %535 = vmatpush.bf16.msra.mxu0 0
  %536 = vmatpush.bf16.msra.mxu0 0
  %537 = vmatpush.bf16.msra.mxu0 0
  %538 = vmatpush.bf16.msra.mxu0 0
  %539 = vmatpush.bf16.msra.mxu0 %v394
  %540 = vmatmul.bf16.gmra.mxu0 %v446
  %v541 = vpop.f32.mrf.mxu0
  %v542 = vadd.f32 %v528, %v541
  %v543 = vpop.f32.mrf.mxu0
  %v544 = vadd.f32 %v530, %v543
  %545 = vdwg.mxu0
  %v546 = vxor.u32 %v542, 2147483648
  %v547 = vxor.u32 %v544, 2147483648
  %v548 = vmul.f32 %v546, 1.442695
  %v549 = vpow.pop %v548
  %v550 = vmul.f32 %v547, 1.442695
  %v551 = vpow.pop %v550
  %v552 = vadd.f32 %v549, 1.0
  %v553 = vadd.f32 %v551, 1.0
  %v554 = vrcp.pop %v552
  %v555 = vmul.f32 %v552, %v554
  %v556 = vsub.f32 1.0, %v555
  %v557 = vmul.f32 %v554, %v556
  %v558 = vadd.f32 %v554, %v557
  %vm559 = vweird.f32 %v552
  %vm560 = vweird.f32 %v554
  %vm561 = vmor %vm559, %vm560
  %v562 = vsel %vm561, %v554, %v558
  %v563 = vand.u32 2147483647, %v552
  %vm564 = vcmp.eq.f32.partialorder %v563, 8.507059e+37
  %v565 = vand.u32 %v552, 2147483648
  %v566 = vor.u32 1.1754944e-38, %v565
  %v567 = vsel %vm564, %v566, %v562
  %v568 = vmul.f32 1.0, %v567
  %v569 = vrcp.pop %v553
  %v570 = vmul.f32 %v553, %v569
  %v571 = vsub.f32 1.0, %v570
  %v572 = vmul.f32 %v569, %v571
  %v573 = vadd.f32 %v569, %v572
  %vm574 = vweird.f32 %v553
  %vm575 = vweird.f32 %v569
  %vm576 = vmor %vm574, %vm575
  %v577 = vsel %vm576, %v569, %v573
  %v578 = vand.u32 2147483647, %v553
  %vm579 = vcmp.eq.f32.partialorder %v578, 8.507059e+37
  %v580 = vand.u32 %v553, 2147483648
  %v581 = vor.u32 1.1754944e-38, %v580
  %v582 = vsel %vm579, %v581, %v577
  %v583 = vmul.f32 1.0, %v582
  %v584 = vpack.c.bf16 %v583, %v568
  %v585 = vld [vmem:[%s3] sm:$0xf]
  %v586 = vld [vmem:[%s3 + $0x4] sm:$0xf]
  %v587 = vld [vmem:[%s3 + $0x8] sm:$0xf]
  %v588 = vld [vmem:[%s3 + $0xc] sm:$0xf]
  %v589 = vld [vmem:[%s3 + $0x10] sm:$0xf]
  %v590 = vld [vmem:[%s3 + $0x14] sm:$0xf]
  %v591 = vld [vmem:[%s3 + $0x18] sm:$0xf]
  %v592 = vld [vmem:[%s3 + $0x1c] sm:$0xf]
  %v593 = vld [vmem:[%s4] sm:$0x1]
  %v595 = vperm.slane %v593, 0
  %v605 = vunpack.c.l.b16 %v585
  %v606 = vunpack.c.l.b16 %v586
  %v607 = vunpack.c.l.b16 %v587
  %v608 = vunpack.c.l.b16 %v588
  %v609 = vunpack.c.l.b16 %v589
  %v610 = vunpack.c.l.b16 %v590
  %v611 = vunpack.c.l.b16 %v591
  %v612 = vunpack.c.l.b16 %v592
  %v613 = vpack.c.b16 %v606, %v605
  %v614 = vpack.c.b16 %v608, %v607
  %v615 = vpack.c.b16 %v610, %v609
  %v616 = vpack.c.b16 %v612, %v611
  %vm621 = vcmask 523264
  %v623 = vsel %vm621, %v584, 0
  %625 = vmatpush.bf16.msra.mxu0 0
  %626 = vmatpush.bf16.msra.mxu0 0
  %627 = vmatpush.bf16.msra.mxu0 0
  %628 = vmatpush.bf16.msra.mxu0 0
  %629 = vmatpush.bf16.msra.mxu0 %v616
  %630 = vmatpush.bf16.msra.mxu0 %v615
  %631 = vmatpush.bf16.msra.mxu0 %v614
  %632 = vmatpush.bf16.msra.mxu0 %v613
  %633 = vmatmul.bf16.gmra.mxu0 %v623
  %v634 = vpop.f32.mrf.mxu0
  %v635 = vadd.f32 %v595, %v634
  %v636 = vpop.f32.mrf.mxu0
  %v637 = vadd.f32 %v595, %v636
  %638 = vdwg.mxu0
  %v639 = vxor.u32 %v635, 2147483648
  %v640 = vxor.u32 %v637, 2147483648
  %v641 = vmul.f32 %v639, 1.442695
  %v642 = vpow.pop %v641
  %v643 = vmul.f32 %v640, 1.442695
  %v644 = vpow.pop %v643
  %v645 = vadd.f32 %v642, 1.0
  %v646 = vadd.f32 %v644, 1.0
  %v647 = vrcp.pop %v645
  %v648 = vmul.f32 %v645, %v647
  %v649 = vsub.f32 1.0, %v648
  %v650 = vmul.f32 %v647, %v649
  %v651 = vadd.f32 %v647, %v650
  %vm652 = vweird.f32 %v645
  %vm653 = vweird.f32 %v647
  %vm654 = vmor %vm652, %vm653
  %v655 = vsel %vm654, %v647, %v651
  %v656 = vand.u32 2147483647, %v645
  %vm657 = vcmp.eq.f32.partialorder %v656, 8.507059e+37
  %v658 = vand.u32 %v645, 2147483648
  %v659 = vor.u32 1.1754944e-38, %v658
  %v660 = vsel %vm657, %v659, %v655
  %v661 = vmul.f32 1.0, %v660
  %v662 = vrcp.pop %v646
  %v663 = vmul.f32 %v646, %v662
  %v664 = vsub.f32 1.0, %v663
  %v665 = vmul.f32 %v662, %v664
  %v666 = vadd.f32 %v662, %v665
  %vm667 = vweird.f32 %v646
  %vm668 = vweird.f32 %v662
  %vm669 = vmor %vm667, %vm668
  %v670 = vsel %vm669, %v662, %v666
  %v671 = vand.u32 2147483647, %v646
  %vm672 = vcmp.eq.f32.partialorder %v671, 8.507059e+37
  %v673 = vand.u32 %v646, 2147483648
  %v674 = vor.u32 1.1754944e-38, %v673
  %v675 = vsel %vm672, %v674, %v670
  %v676 = vmul.f32 1.0, %v675
  %v677 = vpack.c.bf16 %v676, %v661
  %v678 = vld [vmem:[%s5] sm:$0xf]
  %v679 = vld [vmem:[%s5 + $0x4] sm:$0xf]
  %v680 = vld [vmem:[%s5 + $0x8] sm:$0xf]
  %v681 = vld [vmem:[%s5 + $0xc] sm:$0xf]
  %v682 = vld [vmem:[%s6] sm:$0x1]
  %v684 = vperm.slane %v682, 0
  %v690 = vunpack.c.l.b16 %v678
  %v691 = vunpack.c.l.b16 %v679
  %v692 = vunpack.c.l.b16 %v680
  %v693 = vunpack.c.l.b16 %v681
  %v694 = vpack.c.b16 %v691, %v690
  %v695 = vpack.c.b16 %v693, %v692
  %vm698 = vcmask 261120
  %v700 = vsel %vm698, %v677, 0
  %702 = vmatpush.bf16.msra.mxu0 0
  %703 = vmatpush.bf16.msra.mxu0 0
  %704 = vmatpush.bf16.msra.mxu0 0
  %705 = vmatpush.bf16.msra.mxu0 0
  %706 = vmatpush.bf16.msra.mxu0 0
  %707 = vmatpush.bf16.msra.mxu0 0
  %708 = vmatpush.bf16.msra.mxu0 %v695
  %709 = vmatpush.bf16.msra.mxu0 %v694
  %710 = vmatmul.bf16.gmra.mxu0 %v700
  %v711 = vpop.f32.mrf.mxu0
  %v712 = vadd.f32 %v684, %v711
  %v713 = vpop.f32.mrf.mxu0
  %v714 = vadd.f32 %v684, %v713
  %715 = vdwg.mxu0
  %v716 = vxor.u32 %v712, 2147483648
  %v717 = vxor.u32 %v714, 2147483648
  %v718 = vmul.f32 %v716, 1.442695
  %v719 = vpow.pop %v718
  %v720 = vmul.f32 %v717, 1.442695
  %v721 = vpow.pop %v720
  %v722 = vadd.f32 %v719, 1.0
  %v723 = vadd.f32 %v721, 1.0
  %v724 = vrcp.pop %v722
  %v725 = vmul.f32 %v722, %v724
  %v726 = vsub.f32 1.0, %v725
  %v727 = vmul.f32 %v724, %v726
  %v728 = vadd.f32 %v724, %v727
  %vm729 = vweird.f32 %v722
  %vm730 = vweird.f32 %v724
  %vm731 = vmor %vm729, %vm730
  %v732 = vsel %vm731, %v724, %v728
  %v733 = vand.u32 2147483647, %v722
  %vm734 = vcmp.eq.f32.partialorder %v733, 8.507059e+37
  %v735 = vand.u32 %v722, 2147483648
  %v736 = vor.u32 1.1754944e-38, %v735
  %v737 = vsel %vm734, %v736, %v732
  %v738 = vmul.f32 1.0, %v737
  %v739 = vrcp.pop %v723
  %v740 = vmul.f32 %v723, %v739
  %v741 = vsub.f32 1.0, %v740
  %v742 = vmul.f32 %v739, %v741
  %v743 = vadd.f32 %v739, %v742
  %vm744 = vweird.f32 %v723
  %vm745 = vweird.f32 %v739
  %vm746 = vmor %vm744, %vm745
  %v747 = vsel %vm746, %v739, %v743
  %v748 = vand.u32 2147483647, %v723
  %vm749 = vcmp.eq.f32.partialorder %v748, 8.507059e+37
  %v750 = vand.u32 %v723, 2147483648
  %v751 = vor.u32 1.1754944e-38, %v750
  %v752 = vsel %vm749, %v751, %v747
  %v753 = vmul.f32 1.0, %v752
  %vm754 = vcmask 80896
  %755 = vst.msk [vmem:[%s7] sm:$0xff] %vm754, %v738
  %756 = vst.msk [vmem:[%s7 + $0x8] sm:$0xff] %vm754, %v753
  // Predicated region
  $region30: #{mnist_net_forward.1} parent=0 // pred_check
    _
  $region31: #{mnist_net_forward.1} parent=0 // pred_check_branch
    %758 = sbr.rel (0) target = $region33
  $region32: #{mnist_net_forward.1} parent=0 // pred_region
    _
  $region33: #{mnist_net_forward.1} parent=0 // pred_fallthru
    _
  // Predicated region
  $region34: #{mnist_net_forward.1} parent=0 // pred_check
    _
  $region35: #{mnist_net_forward.1} parent=0 // pred_check_branch
    %760 = sbr.rel (0) target = $region37
  $region36: #{mnist_net_forward.1} parent=0 // pred_region
    _
  $region37: #{mnist_net_forward.1} parent=0 // pred_fallthru
    _

</llo_original>
